<compile_context>
chip_gen: v7x
topology: tpu7x:2x2x1
jax: 0.10.0
libtpu: 0.0.40
codegen_flags: <defaults>
</compile_context>

<pallas_src>
import functools

import numpy as np

import jax
import jax.numpy as jnp
from jax import lax
from jax.experimental import pallas as pl
from jax.experimental.pallas import tpu as pltpu


# ---------------------------------------------------------------------------
# Fused kernel: two (Conv3x3, stride 1, pad 1) + ReLU layers.
# ---------------------------------------------------------------------------
def _fused_conv2_kernel(x_ref, band1_ref, band2_ref, bias1_ref, bias2_ref,
                        o_ref, *, h):
    """Fused [Conv3x3 + ReLU] x 2 on lane-dense (nb*H, W*C) activations.

    x_ref:      (M, W*Cin_p)        input block, M = nb*H, 128 lanes
    band*_ref:  (3*W*Cin_l, W*Cout_l)  banded weights, kw taps stacked along K
                                       (kw taps + W zero-pad folded in)
    bias*_ref:  (1, W*Cout_l)          per-pixel-tiled biases
    o_ref:      (M, W*Cout2)           output block (lane-dense, 128 lanes)
    h:          rows per image (static) — used for the H-boundary masks
    """

    def row_shifts(inp):
        # inp: (M, L).  up[r] = inp[r-1], dn[r] = inp[r+1], with zero at the
        # per-sample H boundaries (rows are sample-major, M = nb*h).
        m, lanes = inp.shape
        rid = lax.broadcasted_iota(jnp.int32, (m, lanes), 0) % h
        up = pltpu.roll(inp, shift=1, axis=0)          # out[r] = in[r-1]
        dn = pltpu.roll(inp, shift=m - 1, axis=0)      # out[r] = in[r+1]
        up = jnp.where(rid == 0, 0.0, up)              # zero-pad top row
        dn = jnp.where(rid == h - 1, 0.0, dn)          # zero-pad bottom row
        return up, dn

    def conv3x3_relu(inp, band_ref, bias_ref):
        # One MXU matmul per layer: LHS = [up | center | dn] (M, 3*L),
        # RHS = banded weights stacked along K (3*L, Lout).
        up, dn = row_shifts(inp)
        lhs = jnp.concatenate([up, inp, dn], axis=-1)
        acc = jnp.dot(lhs, band_ref[...], preferred_element_type=jnp.float32)
        return jnp.maximum(acc + bias_ref[...], 0.0)

    x = x_ref[...].astype(jnp.float32)                 # (M, W*Cin_p)
    y1 = conv3x3_relu(x, band1_ref, bias1_ref)         # (M, W*C1)
    y2 = conv3x3_relu(y1, band2_ref, bias2_ref)        # (M, W*C2)
    o_ref[...] = y2.astype(o_ref.dtype)


# ---------------------------------------------------------------------------
# One-time parameter preparation (hoisted out of the per-call forward)
# ---------------------------------------------------------------------------
def _banded_conv_weights(w, width):
    """(KH, KW, Cin, Cout) -> (KH, W*Cin, W*Cout) banded matrices.

    band[kh][s*Cin + c, t*Cout + co] = w[kh, kw, c, co]  with  s = t + (kw-1);
    out-of-range s has no entry, which realizes the zero-pad along W.
    """
    kh, kw, cin, cout = w.shape
    s = np.arange(width)[None, :, None]
    t = np.arange(width)[None, None, :]
    k = np.arange(kw)[:, None, None] - (kw // 2)
    placement = jnp.asarray((s == t + k).astype(np.float32))     # (KW, W, W)
    banded = jnp.einsum('kst,hkcd->hsctd', placement, w)          # (KH,W,Ci,W,Co)
    return banded.reshape(kh, width * cin, width * cout)


def _padded_cin(cin, width):
    """Pad Cin so the packed lane width W*Cin is a multiple of 128 (full vregs)."""
    lanes = width * cin
    if lanes % 128 == 0:
        return cin
    if 128 % width == 0:
        target = ((lanes + 127) // 128) * 128
        return target // width
    return cin


def prepare_fmap_params(params, width):
    """Band + tile the conv weights ONCE (outside the jitted forward).

    params: ((w1, b1), (w2, b2)) with w (KH, KW, Cin, Cout), b (Cout,).
    Returns a tuple of device arrays consumed by `fmap_generator_forward`.
    """
    (w1, b1), (w2, b2) = params
    kh, _, cin, c1 = w1.shape
    _, _, c1b, c2 = w2.shape
    assert c1 == c1b

    cin_p = _padded_cin(cin, width)
    if cin_p != cin:
        # Zero rows of the band for the padded (zero) input channels.
        w1 = jnp.pad(w1, ((0, 0), (0, 0), (0, cin_p - cin), (0, 0)))

    # kw taps folded into the band; kh taps stacked along K for one big matmul.
    band1 = _banded_conv_weights(w1, width).reshape(kh * width * cin_p, width * c1)
    band2 = _banded_conv_weights(w2, width).reshape(kh * width * c1, width * c2)
    bias1 = jnp.tile(b1, width).reshape(1, width * c1)
    bias2 = jnp.tile(b2, width).reshape(1, width * c2)
    return (band1, band2, bias1, bias2)


# ---------------------------------------------------------------------------
# Grid sizing
# ---------------------------------------------------------------------------
def _num_batch_blocks(n):
    """Grid steps along the batch axis.

    Keep a single grid step (whole batch in one block) unless the chip has
    two TensorCores (v7x) AND the batch is large enough that per-core work
    amortizes duplicating the ~384 KiB of banded weights into each core's
    VMEM.  A 2-sample batch is never split.
    """
    try:
        kind = jax.devices()[0].device_kind.lower()
    except Exception:
        kind = ""
    two_tc = "v7" in kind
    if two_tc and n >= 16 and n % 2 == 0:
        return 2
    return 1


# ---------------------------------------------------------------------------
# Forward
# ---------------------------------------------------------------------------
@jax.jit
def fmap_generator_forward(x_nchw, prepped):
    """Equivalent of fmap_generator_class.forward for the instantiated stack
    [Conv2d(Cin->C1,3,pad=1), ReLU, Conv2d(C1->C2,3,pad=1), ReLU].

    x_nchw:  (N, Cin, H, W) -- PyTorch layout at the boundary.
    prepped: output of prepare_fmap_params(params, W).
    """
    band1, band2, bias1, bias2 = prepped
    n, cin, h, w = x_nchw.shape
    cin_p = (band1.shape[0] // 3) // w
    c2 = band2.shape[1] // w

    # NCHW -> lane-dense (N*H, W*Cin_p) packing; pad Cin to fill 128 lanes.
    x_nhwc = jnp.transpose(x_nchw, (0, 2, 3, 1))
    if cin_p != cin:
        x_nhwc = jnp.pad(x_nhwc, ((0, 0), (0, 0), (0, 0), (0, cin_p - cin)))
    x_packed = x_nhwc.reshape(n * h, w * cin_p)

    blocks = _num_batch_blocks(n)
    nb = n // blocks
    mb = nb * h                                     # rows per grid step

    out_packed = pl.pallas_call(
        functools.partial(_fused_conv2_kernel, h=h),
        out_shape=jax.ShapeDtypeStruct((n * h, w * c2), x_nchw.dtype),
        grid_spec=pltpu.PrefetchScalarGridSpec(
            num_scalar_prefetch=0,
            grid=(blocks,),
            in_specs=[
                pl.BlockSpec((mb, w * cin_p), lambda i: (i, 0)),
                pl.BlockSpec(band1.shape, lambda i: (0, 0)),
                pl.BlockSpec(band2.shape, lambda i: (0, 0)),
                pl.BlockSpec(bias1.shape, lambda i: (0, 0)),
                pl.BlockSpec(bias2.shape, lambda i: (0, 0)),
            ],
            out_specs=pl.BlockSpec((mb, w * c2), lambda i: (i, 0)),
        ),
        compiler_params=pltpu.CompilerParams(
            dimension_semantics=("parallel",)),
    )(x_packed, band1, band2, bias1, bias2)

    # Lane-dense (N*H, W*C2) -> NCHW at the PyTorch boundary.
    # (Keep the packed layout instead if the consumer allows — the transpose
    #  is a separate XLA op whose cost rivals the kernel at these sizes.)
    out = out_packed.reshape(n, h, w, c2)
    return jnp.transpose(out, (0, 3, 1, 2))


# ---------------------------------------------------------------------------
# Deterministic instantiation + plain-JAX reference
# ---------------------------------------------------------------------------
def _init_params(key):
    """Conv stack 4->8 and 8->8, 3x3, pad=1 (PyTorch default init range)."""
    layers = [(4, 8), (8, 8)]
    params = []
    for (cin, cout) in layers:
        key, kw_, kb_ = jax.random.split(key, 3)
        fan_in = cin * 3 * 3
        bound = 1.0 / np.sqrt(fan_in)
        w = jax.random.uniform(kw_, (3, 3, cin, cout), jnp.float32,
                               -bound, bound)
        b = jax.random.uniform(kb_, (cout,), jnp.float32, -bound, bound)
        params.append((w, b))
    return tuple(params)


def _reference_forward(x_nchw, params):
    """Plain-JAX reference (lax.conv) to sanity-check the Pallas kernel."""
    x = x_nchw
    for w, b in params:
        w_oihw = jnp.transpose(w, (3, 2, 0, 1))
        x = lax.conv_general_dilated(
            x, w_oihw, window_strides=(1, 1), padding="SAME",
            dimension_numbers=("NCHW", "OIHW", "NCHW"))
        x = jnp.maximum(x + b.reshape(1, -1, 1, 1), 0.0)
    return x


if __name__ == "__main__":
    key = jax.random.PRNGKey(0)
    k_x, k_p = jax.random.split(key)

    # Small shapes consistent with the module: batch=2, channels=4, 16x16.
    x = jax.random.normal(k_x, (2, 4, 16, 16), dtype=jnp.float32)
    params = _init_params(k_p)

    # One-time weight prep (banding + bias tiling), hoisted out of the forward.
    prepped = prepare_fmap_params(params, width=x.shape[3])

    out = jax.block_until_ready(fmap_generator_forward(x, prepped))
    ref = jax.block_until_ready(_reference_forward(x, params))

    assert out.shape == ref.shape == (2, 8, 16, 16)
    assert jnp.allclose(out, ref, atol=1e-4, rtol=1e-4), \
        float(jnp.max(jnp.abs(out - ref)))

    print("KERNEL_OK")
</pallas_src>

<mosaic_0001>
module attributes {stable_mosaic.version = 11 : i64} {
  func.func @_fused_conv2_kernel(%arg0: i32, %arg1: memref<32x128xf32, #tpu.memory_space<vmem>>, %arg2: memref<384x128xf32, #tpu.memory_space<vmem>>, %arg3: memref<384x128xf32, #tpu.memory_space<vmem>>, %arg4: memref<1x128xf32, #tpu.memory_space<vmem>>, %arg5: memref<1x128xf32, #tpu.memory_space<vmem>>, %arg6: memref<32x128xf32, #tpu.memory_space<vmem>>) attributes {dimension_semantics = [#tpu.dimension_semantics<parallel>], iteration_bounds = array<i64: 1>, scalar_prefetch = 0 : i64, scratch_operands = 0 : i64, tpu.core_type = #tpu.core_type<tc>, window_params = [{transform_indices = @transform_0, window_bounds = array<i64: 32, 128>}, {pipeline_mode = #tpu.pipeline_mode<synchronous>, transform_indices = @transform_1, window_bounds = array<i64: 384, 128>}, {pipeline_mode = #tpu.pipeline_mode<synchronous>, transform_indices = @transform_2, window_bounds = array<i64: 384, 128>}, {pipeline_mode = #tpu.pipeline_mode<synchronous>, transform_indices = @transform_3, window_bounds = array<i64: 1, 128>}, {pipeline_mode = #tpu.pipeline_mode<synchronous>, transform_indices = @transform_4, window_bounds = array<i64: 1, 128>}, {transform_indices = @transform_5, window_bounds = array<i64: 32, 128>}]} {
    %c0 = arith.constant 0 : index
    %c0_0 = arith.constant 0 : index
    %0 = vector.load %arg1[%c0, %c0_0] : memref<32x128xf32, #tpu.memory_space<vmem>>, vector<32x128xf32>
    %1 = tpu.iota {dimensions = array<i32: 0>} : vector<32x128xi32>
    %c16_i32 = arith.constant 16 : i32
    %c0_i32 = arith.constant 0 : i32
    %2 = arith.cmpi eq, %c16_i32, %c0_i32 : i32
    %c1_i32 = arith.constant 1 : i32
    %3 = arith.select %2, %c1_i32, %c16_i32 : i32
    %4 = vector.broadcast %3 : i32 to vector<32x128xi32>
    %5 = arith.remsi %1, %4 : vector<32x128xi32>
    %c0_i32_1 = arith.constant 0 : i32
    %6 = vector.broadcast %c0_i32_1 : i32 to vector<32x128xi32>
    %7 = arith.cmpi ne, %5, %6 : vector<32x128xi32>
    %c0_i32_2 = arith.constant 0 : i32
    %8 = vector.broadcast %c0_i32_2 : i32 to vector<32x128xi32>
    %9 = arith.cmpi slt, %5, %8 : vector<32x128xi32>
    %c0_i32_3 = arith.constant 0 : i32
    %10 = arith.cmpi slt, %3, %c0_i32_3 : i32
    %11 = vector.broadcast %10 : i1 to vector<32x128xi1>
    %12 = vector.broadcast %11 : vector<32x128xi1> to vector<32x128xi1>
    %13 = arith.xori %9, %12 : vector<32x128xi1>
    %14 = arith.andi %13, %7 : vector<32x128xi1>
    %15 = vector.broadcast %3 : i32 to vector<32x128xi32>
    %16 = arith.addi %5, %15 : vector<32x128xi32>
    %17 = arith.select %14, %16, %5 : vector<32x128xi1>, vector<32x128xi32>
    %c1_i32_4 = arith.constant 1 : i32
    %18 = tpu.dynamic_rotate %0 by %c1_i32_4 dim 0 : vector<32x128xf32>, i32 -> vector<32x128xf32>
    %c31_i32 = arith.constant 31 : i32
    %19 = tpu.dynamic_rotate %0 by %c31_i32 dim 0 : vector<32x128xf32>, i32 -> vector<32x128xf32>
    %c0_i32_5 = arith.constant 0 : i32
    %20 = vector.broadcast %c0_i32_5 : i32 to vector<32x128xi32>
    %21 = arith.cmpi eq, %17, %20 : vector<32x128xi32>
    %cst = arith.constant 0.000000e+00 : f32
    %22 = vector.broadcast %cst : f32 to vector<32x128xf32>
    %23 = arith.select %21, %22, %18 : vector<32x128xi1>, vector<32x128xf32>
    %c15_i32 = arith.constant 15 : i32
    %24 = vector.broadcast %c15_i32 : i32 to vector<32x128xi32>
    %25 = arith.cmpi eq, %17, %24 : vector<32x128xi32>
    %cst_6 = arith.constant 0.000000e+00 : f32
    %26 = vector.broadcast %cst_6 : f32 to vector<32x128xf32>
    %27 = arith.select %25, %26, %19 : vector<32x128xi1>, vector<32x128xf32>
    %28 = tpu.concatenate %23, %0, %27 in 1 : vector<32x128xf32>, vector<32x128xf32>, vector<32x128xf32> -> vector<32x384xf32>
    %c0_7 = arith.constant 0 : index
    %c0_8 = arith.constant 0 : index
    %29 = vector.load %arg2[%c0_7, %c0_8] : memref<384x128xf32, #tpu.memory_space<vmem>>, vector<384x128xf32>
    %cst_9 = arith.constant dense<0.000000e+00> : vector<32x128xf32>
    %30 = tpu.matmul %28, %29, %cst_9 {dimension_numbers = #tpu.dot_dimension_numbers<[1], [0], [0], [1], [0, 0, 1, 1], [], []>} : vector<32x384xf32>, vector<384x128xf32>, vector<32x128xf32> -> vector<32x128xf32>
    %c0_10 = arith.constant 0 : index
    %c0_11 = arith.constant 0 : index
    %31 = vector.load %arg4[%c0_10, %c0_11] : memref<1x128xf32, #tpu.memory_space<vmem>>, vector<1x128xf32>
    %32 = vector.broadcast %31 : vector<1x128xf32> to vector<32x128xf32>
    %33 = arith.addf %30, %32 : vector<32x128xf32>
    %cst_12 = arith.constant 0.000000e+00 : f32
    %34 = vector.broadcast %cst_12 : f32 to vector<32x128xf32>
    %35 = arith.maximumf %33, %34 : vector<32x128xf32>
    %36 = tpu.iota {dimensions = array<i32: 0>} : vector<32x128xi32>
    %c16_i32_13 = arith.constant 16 : i32
    %c0_i32_14 = arith.constant 0 : i32
    %37 = arith.cmpi eq, %c16_i32_13, %c0_i32_14 : i32
    %c1_i32_15 = arith.constant 1 : i32
    %38 = arith.select %37, %c1_i32_15, %c16_i32_13 : i32
    %39 = vector.broadcast %38 : i32 to vector<32x128xi32>
    %40 = arith.remsi %36, %39 : vector<32x128xi32>
    %c0_i32_16 = arith.constant 0 : i32
    %41 = vector.broadcast %c0_i32_16 : i32 to vector<32x128xi32>
    %42 = arith.cmpi ne, %40, %41 : vector<32x128xi32>
    %c0_i32_17 = arith.constant 0 : i32
    %43 = vector.broadcast %c0_i32_17 : i32 to vector<32x128xi32>
    %44 = arith.cmpi slt, %40, %43 : vector<32x128xi32>
    %c0_i32_18 = arith.constant 0 : i32
    %45 = arith.cmpi slt, %38, %c0_i32_18 : i32
    %46 = vector.broadcast %45 : i1 to vector<32x128xi1>
    %47 = vector.broadcast %46 : vector<32x128xi1> to vector<32x128xi1>
    %48 = arith.xori %44, %47 : vector<32x128xi1>
    %49 = arith.andi %48, %42 : vector<32x128xi1>
    %50 = vector.broadcast %38 : i32 to vector<32x128xi32>
    %51 = arith.addi %40, %50 : vector<32x128xi32>
    %52 = arith.select %49, %51, %40 : vector<32x128xi1>, vector<32x128xi32>
    %c1_i32_19 = arith.constant 1 : i32
    %53 = tpu.dynamic_rotate %35 by %c1_i32_19 dim 0 : vector<32x128xf32>, i32 -> vector<32x128xf32>
    %c31_i32_20 = arith.constant 31 : i32
    %54 = tpu.dynamic_rotate %35 by %c31_i32_20 dim 0 : vector<32x128xf32>, i32 -> vector<32x128xf32>
    %c0_i32_21 = arith.constant 0 : i32
    %55 = vector.broadcast %c0_i32_21 : i32 to vector<32x128xi32>
    %56 = arith.cmpi eq, %52, %55 : vector<32x128xi32>
    %cst_22 = arith.constant 0.000000e+00 : f32
    %57 = vector.broadcast %cst_22 : f32 to vector<32x128xf32>
    %58 = arith.select %56, %57, %53 : vector<32x128xi1>, vector<32x128xf32>
    %c15_i32_23 = arith.constant 15 : i32
    %59 = vector.broadcast %c15_i32_23 : i32 to vector<32x128xi32>
    %60 = arith.cmpi eq, %52, %59 : vector<32x128xi32>
    %cst_24 = arith.constant 0.000000e+00 : f32
    %61 = vector.broadcast %cst_24 : f32 to vector<32x128xf32>
    %62 = arith.select %60, %61, %54 : vector<32x128xi1>, vector<32x128xf32>
    %63 = tpu.concatenate %58, %35, %62 in 1 : vector<32x128xf32>, vector<32x128xf32>, vector<32x128xf32> -> vector<32x384xf32>
    %c0_25 = arith.constant 0 : index
    %c0_26 = arith.constant 0 : index
    %64 = vector.load %arg3[%c0_25, %c0_26] : memref<384x128xf32, #tpu.memory_space<vmem>>, vector<384x128xf32>
    %cst_27 = arith.constant dense<0.000000e+00> : vector<32x128xf32>
    %65 = tpu.matmul %63, %64, %cst_27 {dimension_numbers = #tpu.dot_dimension_numbers<[1], [0], [0], [1], [0, 0, 1, 1], [], []>} : vector<32x384xf32>, vector<384x128xf32>, vector<32x128xf32> -> vector<32x128xf32>
    %c0_28 = arith.constant 0 : index
    %c0_29 = arith.constant 0 : index
    %66 = vector.load %arg5[%c0_28, %c0_29] : memref<1x128xf32, #tpu.memory_space<vmem>>, vector<1x128xf32>
    %67 = vector.broadcast %66 : vector<1x128xf32> to vector<32x128xf32>
    %68 = arith.addf %65, %67 : vector<32x128xf32>
    %cst_30 = arith.constant 0.000000e+00 : f32
    %69 = vector.broadcast %cst_30 : f32 to vector<32x128xf32>
    %70 = arith.maximumf %68, %69 : vector<32x128xf32>
    %c0_31 = arith.constant 0 : index
    %c0_32 = arith.constant 0 : index
    %71 = vector.load %arg6[%c0_31, %c0_32] : memref<32x128xf32, #tpu.memory_space<vmem>>, vector<32x128xf32>
    tpu.vector_store %arg6[%c0_31, %c0_32], %70 {strides = array<i32>} : memref<32x128xf32, #tpu.memory_space<vmem>>, vector<32x128xf32>,
    return
  }
  func.func @transform_0(%arg0: i32) -> (i32, i32) {
    %c0_i32 = arith.constant 0 : i32
    %c0_i32_0 = arith.constant 0 : i32
    return %arg0, %c0_i32 : i32, i32
  }
  func.func @transform_1(%arg0: i32) -> (i32, i32) {
    %c0_i32 = arith.constant 0 : i32
    %c0_i32_0 = arith.constant 0 : i32
    %c0_i32_1 = arith.constant 0 : i32
    return %c0_i32, %c0_i32_0 : i32, i32
  }
  func.func @transform_2(%arg0: i32) -> (i32, i32) {
    %c0_i32 = arith.constant 0 : i32
    %c0_i32_0 = arith.constant 0 : i32
    %c0_i32_1 = arith.constant 0 : i32
    return %c0_i32, %c0_i32_0 : i32, i32
  }
  func.func @transform_3(%arg0: i32) -> (i32, i32) {
    %c0_i32 = arith.constant 0 : i32
    %c0_i32_0 = arith.constant 0 : i32
    %c0_i32_1 = arith.constant 0 : i32
    return %c0_i32, %c0_i32_0 : i32, i32
  }
  func.func @transform_4(%arg0: i32) -> (i32, i32) {
    %c0_i32 = arith.constant 0 : i32
    %c0_i32_0 = arith.constant 0 : i32
    %c0_i32_1 = arith.constant 0 : i32
    return %c0_i32, %c0_i32_0 : i32, i32
  }
  func.func @transform_5(%arg0: i32) -> (i32, i32) {
    %c0_i32 = arith.constant 0 : i32
    %c0_i32_0 = arith.constant 0 : i32
    return %arg0, %c0_i32 : i32, i32
  }
}

</mosaic_0001>

<llo_original>
// kernel: fmap_generator_forward.1
$region0: #{fmap_generator_forward.1}
  #allocation0 [shape = 'u32[]', space=smem, size = 0x4, offset = 0x4, fixed_abs, tag = 'smem constant byte address 0x4 - core index']
  #allocation1 [shape = 'u32[144,128]{1,0:T(1,128)}', space=vmem, size = 0x12000, scoped, tag = 'internal scratch']
  %s0 = inlined_call_operand.vmem [shape: f32[32,128], index: 0, kind: input, shape index: {}]
  %s1 = inlined_call_operand.vmem [shape: f32[384,128], index: 1, kind: input, shape index: {}]
  %s2 = inlined_call_operand.vmem [shape: f32[384,128], index: 2, kind: input, shape index: {}]
  %s3 = inlined_call_operand.vmem [shape: f32[1,128], index: 3, kind: input, shape index: {}]
  %s4 = inlined_call_operand.vmem [shape: f32[1,128], index: 4, kind: input, shape index: {}]
  %s5 = inlined_call_operand.vmem [shape: f32[32,128], index: 5, kind: output, shape index: {}]
  %s6 = sld [smem:[#allocation0]]
  $region30: #{fmap_generator_forward.1} parent=0
    _
  %s8 = ssub.s32 1, %s6
  %s9 = scalar_select 0, %s8, %s6
  // Predicated region
  $region2: #{fmap_generator_forward.1} parent=0 // pred_check
    _
  $region3: #{fmap_generator_forward.1} parent=0 // pred_check_branch
    %11 = sbr.rel (0) target = $region5
  $region4: #{fmap_generator_forward.1} parent=0 // pred_region
    _
  $region5: #{fmap_generator_forward.1} parent=0 // pred_fallthru
    _
  // Predicated region
  $region6: #{fmap_generator_forward.1} parent=0 // pred_check
    _
  $region7: #{fmap_generator_forward.1} parent=0 // pred_check_branch
    %13 = sbr.rel (0) target = $region9
  $region8: #{fmap_generator_forward.1} parent=0 // pred_region
    _
  $region9: #{fmap_generator_forward.1} parent=0 // pred_fallthru
    _
  // Predicated region
  $region10: #{fmap_generator_forward.1} parent=0 // pred_check
    _
  $region11: #{fmap_generator_forward.1} parent=0 // pred_check_branch
    %15 = sbr.rel (0) target = $region13
  $region12: #{fmap_generator_forward.1} parent=0 // pred_region
    _
  $region13: #{fmap_generator_forward.1} parent=0 // pred_fallthru
    _
  // Predicated region
  $region14: #{fmap_generator_forward.1} parent=0 // pred_check
    _
  $region15: #{fmap_generator_forward.1} parent=0 // pred_check_branch
    %17 = sbr.rel (0) target = $region17
  $region16: #{fmap_generator_forward.1} parent=0 // pred_region
    _
  $region17: #{fmap_generator_forward.1} parent=0 // pred_fallthru
    _
  // Predicated region
  $region18: #{fmap_generator_forward.1} parent=0 // pred_check
    _
  $region19: #{fmap_generator_forward.1} parent=0 // pred_check_branch
    %19 = sbr.rel (0) target = $region21
  $region20: #{fmap_generator_forward.1} parent=0 // pred_region
    _
  $region21: #{fmap_generator_forward.1} parent=0 // pred_fallthru
    _
  %v20 = vld [vmem:[%s0] sm:$0xff]
  %v21 = vld [vmem:[%s0 + $0x8] sm:$0xff]
  %v22 = vld [vmem:[%s0 + $0x10] sm:$0xff]
  %v23 = vld [vmem:[%s0 + $0x18] sm:$0xff]
  %v24 = vlaneseq
  %v25 = vshrl.u32 %v24, 7
  %v26 = vadd.s32 %v25, 8
  %v27 = vadd.s32 %v25, 16
  %v28 = vadd.s32 %v25, 24
  %vm29 = vcmp.lt.s32.totalorder %v25, 0
  %v30 = vsub.s32 0, %v25
  %v31 = vsel %vm29, %v30, %v25
  %v32 = vshrl.u32 %v31, 4
  %v33 = vand.u32 %v31, 15
  %v34 = vsub.s32 0, %v33
  %v35 = vsel %vm29, %v34, %v33
  %vm36 = vcmp.lt.s32.totalorder %v26, 0
  %v37 = vsub.s32 0, %v26
  %v38 = vsel %vm36, %v37, %v26
  %v39 = vshrl.u32 %v38, 4
  %v40 = vand.u32 %v38, 15
  %v41 = vsub.s32 0, %v40
  %v42 = vsel %vm36, %v41, %v40
  %vm43 = vcmp.lt.s32.totalorder %v27, 0
  %v44 = vsub.s32 0, %v27
  %v45 = vsel %vm43, %v44, %v27
  %v46 = vshrl.u32 %v45, 4
  %v47 = vand.u32 %v45, 15
  %v48 = vsub.s32 0, %v47
  %v49 = vsel %vm43, %v48, %v47
  %vm50 = vcmp.lt.s32.totalorder %v28, 0
  %v51 = vsub.s32 0, %v28
  %v52 = vsel %vm50, %v51, %v28
  %v53 = vshrl.u32 %v52, 4
  %v54 = vand.u32 %v52, 15
  %v55 = vsub.s32 0, %v54
  %v56 = vsel %vm50, %v55, %v54
  %vm57 = vcmp.ne.s32.totalorder %v35, 0
  %vm58 = vcmp.ne.s32.totalorder %v42, 0
  %vm59 = vcmp.ne.s32.totalorder %v49, 0
  %vm60 = vcmp.ne.s32.totalorder %v56, 0
  %vm61 = vcmp.lt.s32.totalorder %v35, 0
  %vm62 = vcmp.lt.s32.totalorder %v42, 0
  %vm63 = vcmp.lt.s32.totalorder %v49, 0
  %vm64 = vcmp.lt.s32.totalorder %v56, 0
  %vm65 = vmand %vm61, %vm57
  %vm66 = vmand %vm62, %vm58
  %vm67 = vmand %vm63, %vm59
  %vm68 = vmand %vm64, %vm60
  %v69 = vadd.s32 %v35, 16
  %v70 = vadd.s32 %v42, 16
  %v71 = vadd.s32 %v49, 16
  %v72 = vadd.s32 %v56, 16
  %v73 = vsel %vm65, %v69, %v35
  %v74 = vsel %vm66, %v70, %v42
  %v75 = vsel %vm67, %v71, %v49
  %v76 = vsel %vm68, %v72, %v56
  %v77 = vrot.slane %v20, 7
  %v78 = vrot.slane %v21, 7
  %v79 = vrot.slane %v22, 7
  %v80 = vrot.slane %v23, 7
  %vm81 = vcmp.lt.s32.totalorder %v25, 1
  %v82 = vsel %vm81, %v79, %v80
  %v83 = vsel %vm81, %v78, %v79
  %v84 = vsel %vm81, %v77, %v78
  %v85 = vsel %vm81, %v80, %v77
  %v86 = vrot.slane %v20, 1
  %v87 = vrot.slane %v21, 1
  %v88 = vrot.slane %v22, 1
  %v89 = vrot.slane %v23, 1
  %vm90 = vcmp.lt.s32.totalorder %v25, 7
  %v91 = vsel %vm90, %v88, %v89
  %v92 = vsel %vm90, %v87, %v88
  %v93 = vsel %vm90, %v86, %v87
  %v94 = vsel %vm90, %v89, %v86
  %vm95 = vcmp.eq.s32.totalorder %v73, 0
  %vm96 = vcmp.eq.s32.totalorder %v74, 0
  %vm97 = vcmp.eq.s32.totalorder %v75, 0
  %vm98 = vcmp.eq.s32.totalorder %v76, 0
  %v99 = vsel %vm95, 0.0, %v85
  %v100 = vsel %vm96, 0.0, %v84
  %v101 = vsel %vm97, 0.0, %v83
  %v102 = vsel %vm98, 0.0, %v82
  %vm103 = vcmp.eq.s32.totalorder %v73, 15
  %vm104 = vcmp.eq.s32.totalorder %v74, 15
  %vm105 = vcmp.eq.s32.totalorder %v75, 15
  %vm106 = vcmp.eq.s32.totalorder %v76, 15
  %v107 = vsel %vm103, 0.0, %v93
  %v108 = vsel %vm104, 0.0, %v92
  %v109 = vsel %vm105, 0.0, %v91
  %v110 = vsel %vm106, 0.0, %v94
  %v111 = vld [vmem:[%s1] sm:$0xff]
  %v112 = vld [vmem:[%s1 + $0x8] sm:$0xff]
  %v113 = vld [vmem:[%s1 + $0x10] sm:$0xff]
  %v114 = vld [vmem:[%s1 + $0x18] sm:$0xff]
  %v115 = vld [vmem:[%s1 + $0x20] sm:$0xff]
  %v116 = vld [vmem:[%s1 + $0x28] sm:$0xff]
  %v117 = vld [vmem:[%s1 + $0x30] sm:$0xff]
  %v118 = vld [vmem:[%s1 + $0x38] sm:$0xff]
  %v119 = vld [vmem:[%s1 + $0x40] sm:$0xff]
  %v120 = vld [vmem:[%s1 + $0x48] sm:$0xff]
  %v121 = vld [vmem:[%s1 + $0x50] sm:$0xff]
  %v122 = vld [vmem:[%s1 + $0x58] sm:$0xff]
  %v123 = vld [vmem:[%s1 + $0x60] sm:$0xff]
  %v124 = vld [vmem:[%s1 + $0x68] sm:$0xff]
  %v125 = vld [vmem:[%s1 + $0x70] sm:$0xff]
  %v126 = vld [vmem:[%s1 + $0x78] sm:$0xff]
  %v127 = vld [vmem:[%s1 + $0x80] sm:$0xff]
  %v128 = vld [vmem:[%s1 + $0x88] sm:$0xff]
  %v129 = vld [vmem:[%s1 + $0x90] sm:$0xff]
  %v130 = vld [vmem:[%s1 + $0x98] sm:$0xff]
  %v131 = vld [vmem:[%s1 + $0xa0] sm:$0xff]
  %v132 = vld [vmem:[%s1 + $0xa8] sm:$0xff]
  %v133 = vld [vmem:[%s1 + $0xb0] sm:$0xff]
  %v134 = vld [vmem:[%s1 + $0xb8] sm:$0xff]
  %v135 = vld [vmem:[%s1 + $0xc0] sm:$0xff]
  %v136 = vld [vmem:[%s1 + $0xc8] sm:$0xff]
  %v137 = vld [vmem:[%s1 + $0xd0] sm:$0xff]
  %v138 = vld [vmem:[%s1 + $0xd8] sm:$0xff]
  %v139 = vld [vmem:[%s1 + $0xe0] sm:$0xff]
  %v140 = vld [vmem:[%s1 + $0xe8] sm:$0xff]
  %v141 = vld [vmem:[%s1 + $0xf0] sm:$0xff]
  %v142 = vld [vmem:[%s1 + $0xf8] sm:$0xff]
  %v143 = vld [vmem:[%s1 + $0x100] sm:$0xff]
  %v144 = vld [vmem:[%s1 + $0x108] sm:$0xff]
  %v145 = vld [vmem:[%s1 + $0x110] sm:$0xff]
  %v146 = vld [vmem:[%s1 + $0x118] sm:$0xff]
  %v147 = vld [vmem:[%s1 + $0x120] sm:$0xff]
  %v148 = vld [vmem:[%s1 + $0x128] sm:$0xff]
  %v149 = vld [vmem:[%s1 + $0x130] sm:$0xff]
  %v150 = vld [vmem:[%s1 + $0x138] sm:$0xff]
  %v151 = vld [vmem:[%s1 + $0x140] sm:$0xff]
  %v152 = vld [vmem:[%s1 + $0x148] sm:$0xff]
  %v153 = vld [vmem:[%s1 + $0x150] sm:$0xff]
  %v154 = vld [vmem:[%s1 + $0x158] sm:$0xff]
  %v155 = vld [vmem:[%s1 + $0x160] sm:$0xff]
  %v156 = vld [vmem:[%s1 + $0x168] sm:$0xff]
  %v157 = vld [vmem:[%s1 + $0x170] sm:$0xff]
  %v158 = vld [vmem:[%s1 + $0x178] sm:$0xff]
  %v159 = vld [vmem:[%s3] sm:$0x1]
  %v161 = vlaneseq
  %v162 = vshrl.u32 %v161, 7
  %v163 = vsub.s32 0, %v162
  %v164 = vrot.slane %v159, %v163
  %166 = vmatprep.subr.mxu0 0.0
  %167 = vmatpush1.msra.mxu0 %v111
  %168 = vmatprep.subr.mxu0 0.0
  %169 = vmatpush1.msra.mxu0 %v112
  %170 = vmatprep.subr.mxu0 0.0
  %171 = vmatpush1.msra.mxu0 %v113
  %172 = vmatprep.subr.mxu0 0.0
  %173 = vmatpush1.msra.mxu0 %v114
  %174 = vmatprep.subr.mxu0 0.0
  %175 = vmatpush1.msra.mxu0 %v115
  %176 = vmatprep.subr.mxu0 0.0
  %177 = vmatpush1.msra.mxu0 %v116
  %178 = vmatprep.subr.mxu0 0.0
  %179 = vmatpush1.msra.mxu0 %v117
  %180 = vmatprep.subr.mxu0 0.0
  %181 = vmatpush1.msra.mxu0 %v118
  %182 = vmatprep.subr.mxu0 0.0
  %183 = vmatpush1.msra.mxu0 %v119
  %184 = vmatprep.subr.mxu0 0.0
  %185 = vmatpush1.msra.mxu0 %v120
  %186 = vmatprep.subr.mxu0 0.0
  %187 = vmatpush1.msra.mxu0 %v121
  %188 = vmatprep.subr.mxu0 0.0
  %189 = vmatpush1.msra.mxu0 %v122
  %190 = vmatprep.subr.mxu0 0.0
  %191 = vmatpush1.msra.mxu0 %v123
  %192 = vmatprep.subr.mxu0 0.0
  %193 = vmatpush1.msra.mxu0 %v124
  %194 = vmatprep.subr.mxu0 0.0
  %195 = vmatpush1.msra.mxu0 %v125
  %196 = vmatprep.subr.mxu0 0.0
  %197 = vmatpush1.msra.mxu0 %v126
  %198 = vmatprep.subr.mxu0 0.0
  %199 = vmatpush1.msra.mxu0 %v127
  %200 = vmatprep.subr.mxu0 0.0
  %201 = vmatpush1.msra.mxu0 %v128
  %202 = vmatprep.subr.mxu0 0.0
  %203 = vmatpush1.msra.mxu0 %v129
  %204 = vmatprep.subr.mxu0 0.0
  %205 = vmatpush1.msra.mxu0 %v130
  %206 = vmatprep.subr.mxu0 0.0
  %207 = vmatpush1.msra.mxu0 %v131
  %208 = vmatprep.subr.mxu0 0.0
  %209 = vmatpush1.msra.mxu0 %v132
  %210 = vmatprep.subr.mxu0 0.0
  %211 = vmatpush1.msra.mxu0 %v133
  %212 = vmatprep.subr.mxu0 0.0
  %213 = vmatpush1.msra.mxu0 %v134
  %214 = vmatprep.subr.mxu0 0.0
  %215 = vmatpush1.msra.mxu0 %v135
  %216 = vmatprep.subr.mxu0 0.0
  %217 = vmatpush1.msra.mxu0 %v136
  %218 = vmatprep.subr.mxu0 0.0
  %219 = vmatpush1.msra.mxu0 %v137
  %220 = vmatprep.subr.mxu0 0.0
  %221 = vmatpush1.msra.mxu0 %v138
  %222 = vmatprep.subr.mxu0 0.0
  %223 = vmatpush1.msra.mxu0 %v139
  %224 = vmatprep.subr.mxu0 0.0
  %225 = vmatpush1.msra.mxu0 %v140
  %226 = vmatprep.subr.mxu0 0.0
  %227 = vmatpush1.msra.mxu0 %v141
  %228 = vmatprep.subr.mxu0 0.0
  %229 = vmatpush1.msra.mxu0 %v142
  %230 = vmatprep.mubr.f32.mxu0 %v20
  %231 = vmatmul.mubr.f32.gmra.mrb[0].mxu0 %v99
  %v232 = vpop.f32.mrb[0].mxu0
  %v233 = vadd.f32 %v164, %v232
  %v234 = vpop.f32.mrb[0].mxu0
  %235 = vmatprep.mubr.f32.mxu0 %v21
  %236 = vmatmul.mubr.f32.gmra.mrb[0].mxu0 %v100
  %v237 = vpop.f32.mrb[0].mxu0
  %v238 = vadd.f32 %v164, %v237
  %v239 = vpop.f32.mrb[0].mxu0
  %240 = vmatprep.mubr.f32.mxu0 %v22
  %241 = vmatmul.mubr.f32.gmra.mrb[0].mxu0 %v101
  %v242 = vpop.f32.mrb[0].mxu0
  %v243 = vadd.f32 %v164, %v242
  %v244 = vpop.f32.mrb[0].mxu0
  %245 = vmatprep.mubr.f32.mxu0 %v23
  %246 = vmatmul.mubr.f32.gmra.mrb[0].mxu0 %v102
  %v247 = vpop.f32.mrb[0].mxu0
  %v248 = vadd.f32 %v164, %v247
  %v249 = vpop.f32.mrb[0].mxu0
  %250 = vdwg.mxu0
  %251 = vmatprep.subr.mxu0 0.0
  %252 = vmatpush1.msra.mxu0 %v143
  %253 = vmatprep.subr.mxu0 0.0
  %254 = vmatpush1.msra.mxu0 %v144
  %255 = vmatprep.subr.mxu0 0.0
  %256 = vmatpush1.msra.mxu0 %v145
  %257 = vmatprep.subr.mxu0 0.0
  %258 = vmatpush1.msra.mxu0 %v146
  %259 = vmatprep.subr.mxu0 0.0
  %260 = vmatpush1.msra.mxu0 %v147
  %261 = vmatprep.subr.mxu0 0.0
  %262 = vmatpush1.msra.mxu0 %v148
  %263 = vmatprep.subr.mxu0 0.0
  %264 = vmatpush1.msra.mxu0 %v149
  %265 = vmatprep.subr.mxu0 0.0
  %266 = vmatpush1.msra.mxu0 %v150
  %267 = vmatprep.subr.mxu0 0.0
  %268 = vmatpush1.msra.mxu0 %v151
  %269 = vmatprep.subr.mxu0 0.0
  %270 = vmatpush1.msra.mxu0 %v152
  %271 = vmatprep.subr.mxu0 0.0
  %272 = vmatpush1.msra.mxu0 %v153
  %273 = vmatprep.subr.mxu0 0.0
  %274 = vmatpush1.msra.mxu0 %v154
  %275 = vmatprep.subr.mxu0 0.0
  %276 = vmatpush1.msra.mxu0 %v155
  %277 = vmatprep.subr.mxu0 0.0
  %278 = vmatpush1.msra.mxu0 %v156
  %279 = vmatprep.subr.mxu0 0.0
  %280 = vmatpush1.msra.mxu0 %v157
  %281 = vmatprep.subr.mxu0 0.0
  %282 = vmatpush1.msra.mxu0 %v158
  %283 = vmatprep.subr.mxu0 0.0
  %284 = vmatpush1.msra.mxu0 0.0
  %285 = vmatprep.subr.mxu0 0.0
  %286 = vmatpush1.msra.mxu0 0.0
  %287 = vmatprep.subr.mxu0 0.0
  %288 = vmatpush1.msra.mxu0 0.0
  %289 = vmatprep.subr.mxu0 0.0
  %290 = vmatpush1.msra.mxu0 0.0
  %291 = vmatprep.subr.mxu0 0.0
  %292 = vmatpush1.msra.mxu0 0.0
  %293 = vmatprep.subr.mxu0 0.0
  %294 = vmatpush1.msra.mxu0 0.0
  %295 = vmatprep.subr.mxu0 0.0
  %296 = vmatpush1.msra.mxu0 0.0
  %297 = vmatprep.subr.mxu0 0.0
  %298 = vmatpush1.msra.mxu0 0.0
  %299 = vmatprep.subr.mxu0 0.0
  %300 = vmatpush1.msra.mxu0 0.0
  %301 = vmatprep.subr.mxu0 0.0
  %302 = vmatpush1.msra.mxu0 0.0
  %303 = vmatprep.subr.mxu0 0.0
  %304 = vmatpush1.msra.mxu0 0.0
  %305 = vmatprep.subr.mxu0 0.0
  %306 = vmatpush1.msra.mxu0 0.0
  %307 = vmatprep.subr.mxu0 0.0
  %308 = vmatpush1.msra.mxu0 0.0
  %309 = vmatprep.subr.mxu0 0.0
  %310 = vmatpush1.msra.mxu0 0.0
  %311 = vmatprep.subr.mxu0 0.0
  %312 = vmatpush1.msra.mxu0 0.0
  %313 = vmatprep.subr.mxu0 0.0
  %314 = vmatpush1.msra.mxu0 0.0
  %315 = vmatprep.mubr.f32.mxu0 0.0
  %316 = vmatmul.mubr.f32.gmra.mrb[0].mxu0 %v107
  %v317 = vpop.f32.mrb[0].mxu0
  %v318 = vadd.f32 %v233, %v317
  %v319 = vpop.f32.mrb[0].mxu0
  %320 = vmatprep.mubr.f32.mxu0 0.0
  %321 = vmatmul.mubr.f32.gmra.mrb[0].mxu0 %v108
  %v322 = vpop.f32.mrb[0].mxu0
  %v323 = vadd.f32 %v238, %v322
  %v324 = vpop.f32.mrb[0].mxu0
  %325 = vmatprep.mubr.f32.mxu0 0.0
  %326 = vmatmul.mubr.f32.gmra.mrb[0].mxu0 %v109
  %v327 = vpop.f32.mrb[0].mxu0
  %v328 = vadd.f32 %v243, %v327
  %v329 = vpop.f32.mrb[0].mxu0
  %330 = vmatprep.mubr.f32.mxu0 0.0
  %331 = vmatmul.mubr.f32.gmra.mrb[0].mxu0 %v110
  %v332 = vpop.f32.mrb[0].mxu0
  %v333 = vadd.f32 %v248, %v332
  %v334 = vpop.f32.mrb[0].mxu0
  %335 = vdwg.mxu0
  %v336 = vmax.f32 %v318, 0.0
  %v337 = vmax.f32 %v323, 0.0
  %v338 = vmax.f32 %v328, 0.0
  %v339 = vmax.f32 %v333, 0.0
  %v340 = vrot.slane %v336, 7
  %v341 = vrot.slane %v337, 7
  %v342 = vrot.slane %v338, 7
  %v343 = vrot.slane %v339, 7
  %v344 = vsel %vm81, %v342, %v343
  %v345 = vsel %vm81, %v341, %v342
  %v346 = vsel %vm81, %v340, %v341
  %v347 = vsel %vm81, %v343, %v340
  %v348 = vrot.slane %v336, 1
  %v349 = vrot.slane %v337, 1
  %v350 = vrot.slane %v338, 1
  %v351 = vrot.slane %v339, 1
  %v352 = vsel %vm90, %v350, %v351
  %v353 = vsel %vm90, %v349, %v350
  %v354 = vsel %vm90, %v348, %v349
  %v355 = vsel %vm90, %v351, %v348
  %v356 = vsel %vm95, 0.0, %v347
  %v357 = vsel %vm96, 0.0, %v346
  %v358 = vsel %vm97, 0.0, %v345
  %v359 = vsel %vm98, 0.0, %v344
  %v360 = vsel %vm103, 0.0, %v354
  %v361 = vsel %vm104, 0.0, %v353
  %v362 = vsel %vm105, 0.0, %v352
  %v363 = vsel %vm106, 0.0, %v355
  %v364 = vld [vmem:[%s2] sm:$0xff]
  %v365 = vld [vmem:[%s2 + $0x8] sm:$0xff]
  %v366 = vld [vmem:[%s2 + $0x10] sm:$0xff]
  %v367 = vld [vmem:[%s2 + $0x18] sm:$0xff]
  %v368 = vld [vmem:[%s2 + $0x20] sm:$0xff]
  %v369 = vld [vmem:[%s2 + $0x28] sm:$0xff]
  %v370 = vld [vmem:[%s2 + $0x30] sm:$0xff]
  %v371 = vld [vmem:[%s2 + $0x38] sm:$0xff]
  %v372 = vld [vmem:[%s2 + $0x40] sm:$0xff]
  %v373 = vld [vmem:[%s2 + $0x48] sm:$0xff]
  %v374 = vld [vmem:[%s2 + $0x50] sm:$0xff]
  %v375 = vld [vmem:[%s2 + $0x58] sm:$0xff]
  %v376 = vld [vmem:[%s2 + $0x60] sm:$0xff]
  %v377 = vld [vmem:[%s2 + $0x68] sm:$0xff]
  %v378 = vld [vmem:[%s2 + $0x70] sm:$0xff]
  %v379 = vld [vmem:[%s2 + $0x78] sm:$0xff]
  %v380 = vld [vmem:[%s2 + $0x80] sm:$0xff]
  %v381 = vld [vmem:[%s2 + $0x88] sm:$0xff]
  %v382 = vld [vmem:[%s2 + $0x90] sm:$0xff]
  %v383 = vld [vmem:[%s2 + $0x98] sm:$0xff]
  %v384 = vld [vmem:[%s2 + $0xa0] sm:$0xff]
  %v385 = vld [vmem:[%s2 + $0xa8] sm:$0xff]
  %v386 = vld [vmem:[%s2 + $0xb0] sm:$0xff]
  %v387 = vld [vmem:[%s2 + $0xb8] sm:$0xff]
  %v388 = vld [vmem:[%s2 + $0xc0] sm:$0xff]
  %v389 = vld [vmem:[%s2 + $0xc8] sm:$0xff]
  %v390 = vld [vmem:[%s2 + $0xd0] sm:$0xff]
  %v391 = vld [vmem:[%s2 + $0xd8] sm:$0xff]
  %v392 = vld [vmem:[%s2 + $0xe0] sm:$0xff]
  %v393 = vld [vmem:[%s2 + $0xe8] sm:$0xff]
  %v394 = vld [vmem:[%s2 + $0xf0] sm:$0xff]
  %v395 = vld [vmem:[%s2 + $0xf8] sm:$0xff]
  %v396 = vld [vmem:[%s2 + $0x100] sm:$0xff]
  %v397 = vld [vmem:[%s2 + $0x108] sm:$0xff]
  %v398 = vld [vmem:[%s2 + $0x110] sm:$0xff]
  %v399 = vld [vmem:[%s2 + $0x118] sm:$0xff]
  %v400 = vld [vmem:[%s2 + $0x120] sm:$0xff]
  %v401 = vld [vmem:[%s2 + $0x128] sm:$0xff]
  %v402 = vld [vmem:[%s2 + $0x130] sm:$0xff]
  %v403 = vld [vmem:[%s2 + $0x138] sm:$0xff]
  %v404 = vld [vmem:[%s2 + $0x140] sm:$0xff]
  %v405 = vld [vmem:[%s2 + $0x148] sm:$0xff]
  %v406 = vld [vmem:[%s2 + $0x150] sm:$0xff]
  %v407 = vld [vmem:[%s2 + $0x158] sm:$0xff]
  %v408 = vld [vmem:[%s2 + $0x160] sm:$0xff]
  %v409 = vld [vmem:[%s2 + $0x168] sm:$0xff]
  %v410 = vld [vmem:[%s2 + $0x170] sm:$0xff]
  %v411 = vld [vmem:[%s2 + $0x178] sm:$0xff]
  %v412 = vld [vmem:[%s4] sm:$0x1]
  %v414 = vlaneseq
  %v415 = vshrl.u32 %v414, 7
  %v416 = vsub.s32 0, %v415
  %v417 = vrot.slane %v412, %v416
  %419 = vmatprep.subr.mxu0 0.0
  %420 = vmatpush1.msra.mxu0 %v364
  %421 = vmatprep.subr.mxu0 0.0
  %422 = vmatpush1.msra.mxu0 %v365
  %423 = vmatprep.subr.mxu0 0.0
  %424 = vmatpush1.msra.mxu0 %v366
  %425 = vmatprep.subr.mxu0 0.0
  %426 = vmatpush1.msra.mxu0 %v367
  %427 = vmatprep.subr.mxu0 0.0
  %428 = vmatpush1.msra.mxu0 %v368
  %429 = vmatprep.subr.mxu0 0.0
  %430 = vmatpush1.msra.mxu0 %v369
  %431 = vmatprep.subr.mxu0 0.0
  %432 = vmatpush1.msra.mxu0 %v370
  %433 = vmatprep.subr.mxu0 0.0
  %434 = vmatpush1.msra.mxu0 %v371
  %435 = vmatprep.subr.mxu0 0.0
  %436 = vmatpush1.msra.mxu0 %v372
  %437 = vmatprep.subr.mxu0 0.0
  %438 = vmatpush1.msra.mxu0 %v373
  %439 = vmatprep.subr.mxu0 0.0
  %440 = vmatpush1.msra.mxu0 %v374
  %441 = vmatprep.subr.mxu0 0.0
  %442 = vmatpush1.msra.mxu0 %v375
  %443 = vmatprep.subr.mxu0 0.0
  %444 = vmatpush1.msra.mxu0 %v376
  %445 = vmatprep.subr.mxu0 0.0
  %446 = vmatpush1.msra.mxu0 %v377
  %447 = vmatprep.subr.mxu0 0.0
  %448 = vmatpush1.msra.mxu0 %v378
  %449 = vmatprep.subr.mxu0 0.0
  %450 = vmatpush1.msra.mxu0 %v379
  %451 = vmatprep.subr.mxu0 0.0
  %452 = vmatpush1.msra.mxu0 %v380
  %453 = vmatprep.subr.mxu0 0.0
  %454 = vmatpush1.msra.mxu0 %v381
  %455 = vmatprep.subr.mxu0 0.0
  %456 = vmatpush1.msra.mxu0 %v382
  %457 = vmatprep.subr.mxu0 0.0
  %458 = vmatpush1.msra.mxu0 %v383
  %459 = vmatprep.subr.mxu0 0.0
  %460 = vmatpush1.msra.mxu0 %v384
  %461 = vmatprep.subr.mxu0 0.0
  %462 = vmatpush1.msra.mxu0 %v385
  %463 = vmatprep.subr.mxu0 0.0
  %464 = vmatpush1.msra.mxu0 %v386
  %465 = vmatprep.subr.mxu0 0.0
  %466 = vmatpush1.msra.mxu0 %v387
  %467 = vmatprep.subr.mxu0 0.0
  %468 = vmatpush1.msra.mxu0 %v388
  %469 = vmatprep.subr.mxu0 0.0
  %470 = vmatpush1.msra.mxu0 %v389
  %471 = vmatprep.subr.mxu0 0.0
  %472 = vmatpush1.msra.mxu0 %v390
  %473 = vmatprep.subr.mxu0 0.0
  %474 = vmatpush1.msra.mxu0 %v391
  %475 = vmatprep.subr.mxu0 0.0
  %476 = vmatpush1.msra.mxu0 %v392
  %477 = vmatprep.subr.mxu0 0.0
  %478 = vmatpush1.msra.mxu0 %v393
  %479 = vmatprep.subr.mxu0 0.0
  %480 = vmatpush1.msra.mxu0 %v394
  %481 = vmatprep.subr.mxu0 0.0
  %482 = vmatpush1.msra.mxu0 %v395
  %483 = vmatprep.mubr.f32.mxu0 %v336
  %484 = vmatmul.mubr.f32.gmra.mrb[0].mxu0 %v356
  %v485 = vpop.f32.mrb[0].mxu0
  %v486 = vadd.f32 %v417, %v485
  %v487 = vpop.f32.mrb[0].mxu0
  %488 = vmatprep.mubr.f32.mxu0 %v337
  %489 = vmatmul.mubr.f32.gmra.mrb[0].mxu0 %v357
  %v490 = vpop.f32.mrb[0].mxu0
  %v491 = vadd.f32 %v417, %v490
  %v492 = vpop.f32.mrb[0].mxu0
  %493 = vmatprep.mubr.f32.mxu0 %v338
  %494 = vmatmul.mubr.f32.gmra.mrb[0].mxu0 %v358
  %v495 = vpop.f32.mrb[0].mxu0
  %v496 = vadd.f32 %v417, %v495
  %v497 = vpop.f32.mrb[0].mxu0
  %498 = vmatprep.mubr.f32.mxu0 %v339
  %499 = vmatmul.mubr.f32.gmra.mrb[0].mxu0 %v359
  %v500 = vpop.f32.mrb[0].mxu0
  %v501 = vadd.f32 %v417, %v500
  %v502 = vpop.f32.mrb[0].mxu0
  %503 = vdwg.mxu0
  %504 = vmatprep.subr.mxu0 0.0
  %505 = vmatpush1.msra.mxu0 %v396
  %506 = vmatprep.subr.mxu0 0.0
  %507 = vmatpush1.msra.mxu0 %v397
  %508 = vmatprep.subr.mxu0 0.0
  %509 = vmatpush1.msra.mxu0 %v398
  %510 = vmatprep.subr.mxu0 0.0
  %511 = vmatpush1.msra.mxu0 %v399
  %512 = vmatprep.subr.mxu0 0.0
  %513 = vmatpush1.msra.mxu0 %v400
  %514 = vmatprep.subr.mxu0 0.0
  %515 = vmatpush1.msra.mxu0 %v401
  %516 = vmatprep.subr.mxu0 0.0
  %517 = vmatpush1.msra.mxu0 %v402
  %518 = vmatprep.subr.mxu0 0.0
  %519 = vmatpush1.msra.mxu0 %v403
  %520 = vmatprep.subr.mxu0 0.0
  %521 = vmatpush1.msra.mxu0 %v404
  %522 = vmatprep.subr.mxu0 0.0
  %523 = vmatpush1.msra.mxu0 %v405
  %524 = vmatprep.subr.mxu0 0.0
  %525 = vmatpush1.msra.mxu0 %v406
  %526 = vmatprep.subr.mxu0 0.0
  %527 = vmatpush1.msra.mxu0 %v407
  %528 = vmatprep.subr.mxu0 0.0
  %529 = vmatpush1.msra.mxu0 %v408
  %530 = vmatprep.subr.mxu0 0.0
  %531 = vmatpush1.msra.mxu0 %v409
  %532 = vmatprep.subr.mxu0 0.0
  %533 = vmatpush1.msra.mxu0 %v410
  %534 = vmatprep.subr.mxu0 0.0
  %535 = vmatpush1.msra.mxu0 %v411
  %536 = vmatprep.subr.mxu0 0.0
  %537 = vmatpush1.msra.mxu0 0.0
  %538 = vmatprep.subr.mxu0 0.0
  %539 = vmatpush1.msra.mxu0 0.0
  %540 = vmatprep.subr.mxu0 0.0
  %541 = vmatpush1.msra.mxu0 0.0
  %542 = vmatprep.subr.mxu0 0.0
  %543 = vmatpush1.msra.mxu0 0.0
  %544 = vmatprep.subr.mxu0 0.0
  %545 = vmatpush1.msra.mxu0 0.0
  %546 = vmatprep.subr.mxu0 0.0
  %547 = vmatpush1.msra.mxu0 0.0
  %548 = vmatprep.subr.mxu0 0.0
  %549 = vmatpush1.msra.mxu0 0.0
  %550 = vmatprep.subr.mxu0 0.0
  %551 = vmatpush1.msra.mxu0 0.0
  %552 = vmatprep.subr.mxu0 0.0
  %553 = vmatpush1.msra.mxu0 0.0
  %554 = vmatprep.subr.mxu0 0.0
  %555 = vmatpush1.msra.mxu0 0.0
  %556 = vmatprep.subr.mxu0 0.0
  %557 = vmatpush1.msra.mxu0 0.0
  %558 = vmatprep.subr.mxu0 0.0
  %559 = vmatpush1.msra.mxu0 0.0
  %560 = vmatprep.subr.mxu0 0.0
  %561 = vmatpush1.msra.mxu0 0.0
  %562 = vmatprep.subr.mxu0 0.0
  %563 = vmatpush1.msra.mxu0 0.0
  %564 = vmatprep.subr.mxu0 0.0
  %565 = vmatpush1.msra.mxu0 0.0
  %566 = vmatprep.subr.mxu0 0.0
  %567 = vmatpush1.msra.mxu0 0.0
  %568 = vmatprep.mubr.f32.mxu0 0.0
  %569 = vmatmul.mubr.f32.gmra.mrb[0].mxu0 %v360
  %v570 = vpop.f32.mrb[0].mxu0
  %v571 = vadd.f32 %v486, %v570
  %v572 = vpop.f32.mrb[0].mxu0
  %573 = vmatprep.mubr.f32.mxu0 0.0
  %574 = vmatmul.mubr.f32.gmra.mrb[0].mxu0 %v361
  %v575 = vpop.f32.mrb[0].mxu0
  %v576 = vadd.f32 %v491, %v575
  %v577 = vpop.f32.mrb[0].mxu0
  %578 = vmatprep.mubr.f32.mxu0 0.0
  %579 = vmatmul.mubr.f32.gmra.mrb[0].mxu0 %v362
  %v580 = vpop.f32.mrb[0].mxu0
  %v581 = vadd.f32 %v496, %v580
  %v582 = vpop.f32.mrb[0].mxu0
  %583 = vmatprep.mubr.f32.mxu0 0.0
  %584 = vmatmul.mubr.f32.gmra.mrb[0].mxu0 %v363
  %v585 = vpop.f32.mrb[0].mxu0
  %v586 = vadd.f32 %v501, %v585
  %v587 = vpop.f32.mrb[0].mxu0
  %588 = vdwg.mxu0
  %v589 = vmax.f32 %v571, 0.0
  %v590 = vmax.f32 %v576, 0.0
  %v591 = vmax.f32 %v581, 0.0
  %v592 = vmax.f32 %v586, 0.0
  %593 = vst [vmem:[%s5] sm:$0xff] %v589
  %594 = vst [vmem:[%s5 + $0x8] sm:$0xff] %v590
  %595 = vst [vmem:[%s5 + $0x10] sm:$0xff] %v591
  %596 = vst [vmem:[%s5 + $0x18] sm:$0xff] %v592
  // Predicated region
  $region22: #{fmap_generator_forward.1} parent=0 // pred_check
    _
  $region23: #{fmap_generator_forward.1} parent=0 // pred_check_branch
    %598 = sbr.rel (0) target = $region25
  $region24: #{fmap_generator_forward.1} parent=0 // pred_region
    _
  $region25: #{fmap_generator_forward.1} parent=0 // pred_fallthru
    _
  // Predicated region
  $region26: #{fmap_generator_forward.1} parent=0 // pred_check
    _
  $region27: #{fmap_generator_forward.1} parent=0 // pred_check_branch
    %600 = sbr.rel (0) target = $region29
  $region28: #{fmap_generator_forward.1} parent=0 // pred_region
    _
  $region29: #{fmap_generator_forward.1} parent=0 // pred_fallthru
    _

</llo_original>
